<compile_context>
chip_gen: v7x
topology: tpu7x:2x2x1
jax: 0.10.0
libtpu: 0.0.40
codegen_flags: <defaults>
</compile_context>

<pallas_src>
import functools

import jax
import jax.numpy as jnp
from jax.experimental import pallas as pl
from jax.experimental.pallas import tpu as pltpu


def _round_up(n, m):
    return ((n + m - 1) // m) * m


def _mlp_kernel(x_ref, w0_ref, wrest_ref, b_ref, o_ref, *, nlabels):
    """Fused 5-layer MLP + softmax for one batch tile.

    x_ref:     (TB, 12)        bf16   batch tile
    w0_ref:    (12, 64)        bf16   first layer weight
    wrest_ref: (4, 64, 64)     bf16   layers 1..4, zero-padded to 64x64
    b_ref:     (5, 1, 64)      f32    biases, zero-padded to width 64
    o_ref:     (TB, nlabels)   f32    softmax probabilities
    """
    # Layer 0: bf16 x bf16 on the MXU, f32 accumulation.
    h = jnp.dot(x_ref[...], w0_ref[...], preferred_element_type=jnp.float32)
    h = jnp.maximum(h + b_ref[0], 0.0)                      # (TB, 64) f32

    n_rest = wrest_ref.shape[0]
    for l in range(n_rest):
        h = jnp.dot(h.astype(jnp.bfloat16), wrest_ref[l],
                    preferred_element_type=jnp.float32)
        h = h + b_ref[l + 1]
        if l < n_rest - 1:                                  # last layer: no ReLU
            h = jnp.maximum(h, 0.0)
        # Padded columns of W/b are zero, so padded columns of h stay exactly 0.

    # Softmax over the real label columns (F.softmax on 2-D input -> dim=1).
    logits = h[:, :nlabels]                                 # (TB, nlabels) f32
    m = jnp.max(logits, axis=-1, keepdims=True)
    e = jnp.exp(logits - m)
    denom = jnp.sum(e, axis=-1, keepdims=True)
    o_ref[...] = (e * pl.reciprocal(denom, approx=True)).astype(o_ref.dtype)


def pack_params(params):
    """Pack the 10 (W, b) operands into 3 VMEM-friendly operands.

    params: list of (W, b), W: (in, out) f32, b: (1, out) f32.
    Returns (w0_bf16, wrest_bf16, bpack_f32, nlabels).
    """
    w0 = params[0][0]
    H = w0.shape[1]                                          # 64
    n_rest = len(params) - 1

    wrest = jnp.zeros((n_rest, H, H), jnp.bfloat16)
    for l, (w, _) in enumerate(params[1:]):
        wrest = wrest.at[l, :w.shape[0], :w.shape[1]].set(w.astype(jnp.bfloat16))

    bpack = jnp.zeros((len(params), 1, H), jnp.float32)
    for l, (_, b) in enumerate(params):
        bpack = bpack.at[l, 0, :b.shape[1]].set(b.reshape(-1).astype(jnp.float32))

    nlabels = params[-1][0].shape[1]
    return w0.astype(jnp.bfloat16), wrest, bpack, nlabels


def example_nn_forward(x, packed, tb=2048):
    """x: (B, 12) f32. packed: output of pack_params."""
    w0, wrest, bpack, nlabels = packed
    B, F = x.shape
    H = w0.shape[1]
    n_rest = wrest.shape[0]

    # Batch tile: big enough to amortize per-step overhead, small enough to fit
    # comfortably in the default scoped VMEM on v5e (16 MiB) / v7x (32/64 MiB).
    TB = min(tb, _round_up(B, 8))
    grid = (pl.cdiv(B, TB),)

    kernel = functools.partial(_mlp_kernel, nlabels=nlabels)

    return pl.pallas_call(
        kernel,
        out_shape=jax.ShapeDtypeStruct((B, nlabels), jnp.float32),
        grid=grid,
        in_specs=[
            pl.BlockSpec((TB, F), lambda i: (i, 0)),               # x: batch-tiled
            pl.BlockSpec((F, H), lambda i: (0, 0)),                # w0: resident
            pl.BlockSpec((n_rest, H, H), lambda i: (0, 0, 0)),     # W1..W4: resident
            pl.BlockSpec((n_rest + 1, 1, H), lambda i: (0, 0, 0)), # biases: resident
        ],
        out_specs=pl.BlockSpec((TB, nlabels), lambda i: (i, 0)),
        compiler_params=pltpu.CompilerParams(
            dimension_semantics=("parallel",),
        ),
    )(x.astype(jnp.bfloat16), w0, wrest, bpack)


def init_params(key, input_size=12, num_units=64, nlabels=2):
    """Deterministic PyTorch-Linear-style init (uniform +/- 1/sqrt(fan_in))."""
    dims = [(input_size, num_units), (num_units, 32), (32, 16), (16, 8), (8, nlabels)]
    params = []
    for (fan_in, fan_out) in dims:
        key, kw, kb = jax.random.split(key, 3)
        bound = 1.0 / jnp.sqrt(jnp.float32(fan_in))
        w = jax.random.uniform(kw, (fan_in, fan_out), jnp.float32, -bound, bound)
        b = jax.random.uniform(kb, (1, fan_out), jnp.float32, -bound, bound)
        params.append((w, b))
    return params


def _reference_forward(x, params):
    h = x
    for (w, b) in params[:-1]:
        h = jnp.maximum(h @ w + b, 0.0)
    logits = h @ params[-1][0] + params[-1][1]
    return jax.nn.softmax(logits, axis=-1)


if __name__ == "__main__":
    key = jax.random.PRNGKey(0)
    key, kx = jax.random.split(key)

    B, input_size = 8, 12
    x = jax.random.normal(kx, (B, input_size), jnp.float32)
    params = init_params(key, input_size=input_size, num_units=64, nlabels=2)
    packed = pack_params(params)

    out = example_nn_forward(x, packed)
    out = jax.block_until_ready(out)

    ref = _reference_forward(x, params)
    assert out.shape == (B, 2)
    # bf16 MXU inputs -> looser tolerance than the pure-f32 version.
    assert jnp.allclose(out, ref, atol=2e-2, rtol=2e-2)
    assert jnp.allclose(jnp.sum(out, axis=-1), 1.0, atol=5e-3)

    # Exercise the batch-tiled grid path (multiple tiles, resident weights).
    xb = jax.random.normal(jax.random.PRNGKey(1), (256, input_size), jnp.float32)
    outb = jax.block_until_ready(example_nn_forward(xb, packed, tb=128))
    refb = _reference_forward(xb, params)
    assert jnp.allclose(outb, refb, atol=2e-2, rtol=2e-2)

    print("KERNEL_OK")
</pallas_src>

<mosaic_0001>
module attributes {stable_mosaic.version = 11 : i64} {
  func.func @_mlp_kernel(%arg0: i32, %arg1: memref<8x12xbf16, #tpu.memory_space<vmem>>, %arg2: memref<12x64xbf16, #tpu.memory_space<vmem>>, %arg3: memref<4x64x64xbf16, #tpu.memory_space<vmem>>, %arg4: memref<5x1x64xf32, #tpu.memory_space<vmem>>, %arg5: memref<8x2xf32, #tpu.memory_space<vmem>>) attributes {dimension_semantics = [#tpu.dimension_semantics<parallel>], iteration_bounds = array<i64: 1>, scalar_prefetch = 0 : i64, scratch_operands = 0 : i64, tpu.core_type = #tpu.core_type<tc>, window_params = [{transform_indices = @transform_0, window_bounds = array<i64: 8, 12>}, {pipeline_mode = #tpu.pipeline_mode<synchronous>, transform_indices = @transform_1, window_bounds = array<i64: 12, 64>}, {pipeline_mode = #tpu.pipeline_mode<synchronous>, transform_indices = @transform_2, window_bounds = array<i64: 4, 64, 64>}, {pipeline_mode = #tpu.pipeline_mode<synchronous>, transform_indices = @transform_3, window_bounds = array<i64: 5, 1, 64>}, {transform_indices = @transform_4, window_bounds = array<i64: 8, 2>}]} {
    %c0 = arith.constant 0 : index
    %c0_0 = arith.constant 0 : index
    %0 = vector.load %arg1[%c0, %c0_0] : memref<8x12xbf16, #tpu.memory_space<vmem>>, vector<8x12xbf16>
    %c0_1 = arith.constant 0 : index
    %c0_2 = arith.constant 0 : index
    %1 = vector.load %arg2[%c0_1, %c0_2] : memref<12x64xbf16, #tpu.memory_space<vmem>>, vector<12x64xbf16>
    %cst = arith.constant dense<0.000000e+00> : vector<8x64xf32>
    %2 = tpu.matmul %0, %1, %cst {dimension_numbers = #tpu.dot_dimension_numbers<[1], [0], [0], [1], [0, 0, 1, 1], [], []>} : vector<8x12xbf16>, vector<12x64xbf16>, vector<8x64xf32> -> vector<8x64xf32>
    %c0_3 = arith.constant 0 : index
    %c0_4 = arith.constant 0 : index
    %c0_5 = arith.constant 0 : index
    %3 = vector.load %arg4[%c0_3, %c0_4, %c0_5] : memref<5x1x64xf32, #tpu.memory_space<vmem>>, vector<1x1x64xf32>
    %4 = vector.shape_cast %3 : vector<1x1x64xf32> to vector<1x64xf32>
    %5 = vector.broadcast %4 : vector<1x64xf32> to vector<8x64xf32>
    %6 = arith.addf %2, %5 : vector<8x64xf32>
    %cst_6 = arith.constant 0.000000e+00 : f32
    %7 = vector.broadcast %cst_6 : f32 to vector<8x64xf32>
    %8 = arith.maximumf %6, %7 : vector<8x64xf32>
    %9 = arith.truncf %8 : vector<8x64xf32> to vector<8x64xbf16>
    %c0_7 = arith.constant 0 : index
    %c0_8 = arith.constant 0 : index
    %c0_9 = arith.constant 0 : index
    %10 = vector.load %arg3[%c0_7, %c0_8, %c0_9] : memref<4x64x64xbf16, #tpu.memory_space<vmem>>, vector<1x64x64xbf16>
    %11 = vector.shape_cast %10 : vector<1x64x64xbf16> to vector<64x64xbf16>
    %cst_10 = arith.constant dense<0.000000e+00> : vector<8x64xf32>
    %12 = tpu.matmul %9, %11, %cst_10 {dimension_numbers = #tpu.dot_dimension_numbers<[1], [0], [0], [1], [0, 0, 1, 1], [], []>} : vector<8x64xbf16>, vector<64x64xbf16>, vector<8x64xf32> -> vector<8x64xf32>
    %c1 = arith.constant 1 : index
    %c0_11 = arith.constant 0 : index
    %c0_12 = arith.constant 0 : index
    %13 = vector.load %arg4[%c1, %c0_11, %c0_12] : memref<5x1x64xf32, #tpu.memory_space<vmem>>, vector<1x1x64xf32>
    %14 = vector.shape_cast %13 : vector<1x1x64xf32> to vector<1x64xf32>
    %15 = vector.broadcast %14 : vector<1x64xf32> to vector<8x64xf32>
    %16 = arith.addf %12, %15 : vector<8x64xf32>
    %cst_13 = arith.constant 0.000000e+00 : f32
    %17 = vector.broadcast %cst_13 : f32 to vector<8x64xf32>
    %18 = arith.maximumf %16, %17 : vector<8x64xf32>
    %19 = arith.truncf %18 : vector<8x64xf32> to vector<8x64xbf16>
    %c1_14 = arith.constant 1 : index
    %c0_15 = arith.constant 0 : index
    %c0_16 = arith.constant 0 : index
    %20 = vector.load %arg3[%c1_14, %c0_15, %c0_16] : memref<4x64x64xbf16, #tpu.memory_space<vmem>>, vector<1x64x64xbf16>
    %21 = vector.shape_cast %20 : vector<1x64x64xbf16> to vector<64x64xbf16>
    %cst_17 = arith.constant dense<0.000000e+00> : vector<8x64xf32>
    %22 = tpu.matmul %19, %21, %cst_17 {dimension_numbers = #tpu.dot_dimension_numbers<[1], [0], [0], [1], [0, 0, 1, 1], [], []>} : vector<8x64xbf16>, vector<64x64xbf16>, vector<8x64xf32> -> vector<8x64xf32>
    %c2 = arith.constant 2 : index
    %c0_18 = arith.constant 0 : index
    %c0_19 = arith.constant 0 : index
    %23 = vector.load %arg4[%c2, %c0_18, %c0_19] : memref<5x1x64xf32, #tpu.memory_space<vmem>>, vector<1x1x64xf32>
    %24 = vector.shape_cast %23 : vector<1x1x64xf32> to vector<1x64xf32>
    %25 = vector.broadcast %24 : vector<1x64xf32> to vector<8x64xf32>
    %26 = arith.addf %22, %25 : vector<8x64xf32>
    %cst_20 = arith.constant 0.000000e+00 : f32
    %27 = vector.broadcast %cst_20 : f32 to vector<8x64xf32>
    %28 = arith.maximumf %26, %27 : vector<8x64xf32>
    %29 = arith.truncf %28 : vector<8x64xf32> to vector<8x64xbf16>
    %c2_21 = arith.constant 2 : index
    %c0_22 = arith.constant 0 : index
    %c0_23 = arith.constant 0 : index
    %30 = vector.load %arg3[%c2_21, %c0_22, %c0_23] : memref<4x64x64xbf16, #tpu.memory_space<vmem>>, vector<1x64x64xbf16>
    %31 = vector.shape_cast %30 : vector<1x64x64xbf16> to vector<64x64xbf16>
    %cst_24 = arith.constant dense<0.000000e+00> : vector<8x64xf32>
    %32 = tpu.matmul %29, %31, %cst_24 {dimension_numbers = #tpu.dot_dimension_numbers<[1], [0], [0], [1], [0, 0, 1, 1], [], []>} : vector<8x64xbf16>, vector<64x64xbf16>, vector<8x64xf32> -> vector<8x64xf32>
    %c3 = arith.constant 3 : index
    %c0_25 = arith.constant 0 : index
    %c0_26 = arith.constant 0 : index
    %33 = vector.load %arg4[%c3, %c0_25, %c0_26] : memref<5x1x64xf32, #tpu.memory_space<vmem>>, vector<1x1x64xf32>
    %34 = vector.shape_cast %33 : vector<1x1x64xf32> to vector<1x64xf32>
    %35 = vector.broadcast %34 : vector<1x64xf32> to vector<8x64xf32>
    %36 = arith.addf %32, %35 : vector<8x64xf32>
    %cst_27 = arith.constant 0.000000e+00 : f32
    %37 = vector.broadcast %cst_27 : f32 to vector<8x64xf32>
    %38 = arith.maximumf %36, %37 : vector<8x64xf32>
    %39 = arith.truncf %38 : vector<8x64xf32> to vector<8x64xbf16>
    %c3_28 = arith.constant 3 : index
    %c0_29 = arith.constant 0 : index
    %c0_30 = arith.constant 0 : index
    %40 = vector.load %arg3[%c3_28, %c0_29, %c0_30] : memref<4x64x64xbf16, #tpu.memory_space<vmem>>, vector<1x64x64xbf16>
    %41 = vector.shape_cast %40 : vector<1x64x64xbf16> to vector<64x64xbf16>
    %cst_31 = arith.constant dense<0.000000e+00> : vector<8x64xf32>
    %42 = tpu.matmul %39, %41, %cst_31 {dimension_numbers = #tpu.dot_dimension_numbers<[1], [0], [0], [1], [0, 0, 1, 1], [], []>} : vector<8x64xbf16>, vector<64x64xbf16>, vector<8x64xf32> -> vector<8x64xf32>
    %c4 = arith.constant 4 : index
    %c0_32 = arith.constant 0 : index
    %c0_33 = arith.constant 0 : index
    %43 = vector.load %arg4[%c4, %c0_32, %c0_33] : memref<5x1x64xf32, #tpu.memory_space<vmem>>, vector<1x1x64xf32>
    %44 = vector.shape_cast %43 : vector<1x1x64xf32> to vector<1x64xf32>
    %45 = vector.broadcast %44 : vector<1x64xf32> to vector<8x64xf32>
    %46 = arith.addf %42, %45 : vector<8x64xf32>
    %47 = vector.extract_strided_slice %46 {offsets = [0, 0], sizes = [8, 2], strides = [1, 1]} : vector<8x64xf32> to vector<8x2xf32>
    %cst_34 = arith.constant dense<0xFF800000> : vector<8xf32>
    %48 = vector.multi_reduction <maximumf>, %47, %cst_34 [1] : vector<8x2xf32> to vector<8xf32>
    %49 = vector.shape_cast %48 : vector<8xf32> to vector<8x1xf32>
    %50 = vector.broadcast %49 : vector<8x1xf32> to vector<8x2xf32>
    %51 = arith.subf %47, %50 : vector<8x2xf32>
    %52 = math.exp %51 : vector<8x2xf32>
    %cst_35 = arith.constant dense<0.000000e+00> : vector<8xf32>
    %53 = vector.multi_reduction <add>, %52, %cst_35 [1] : vector<8x2xf32> to vector<8xf32>
    %54 = vector.shape_cast %53 : vector<8xf32> to vector<8x1xf32>
    %55 = tpu.reciprocal %54 {approx = true} : vector<8x1xf32> -> vector<8x1xf32>
    %56 = vector.broadcast %55 : vector<8x1xf32> to vector<8x2xf32>
    %57 = arith.mulf %52, %56 : vector<8x2xf32>
    %c0_36 = arith.constant 0 : index
    %c0_37 = arith.constant 0 : index
    %58 = vector.load %arg5[%c0_36, %c0_37] : memref<8x2xf32, #tpu.memory_space<vmem>>, vector<8x2xf32>
    tpu.vector_store %arg5[%c0_36, %c0_37], %57 {strides = array<i32>} : memref<8x2xf32, #tpu.memory_space<vmem>>, vector<8x2xf32>,
    return
  }
  func.func @transform_0(%arg0: i32) -> (i32, i32) {
    %c0_i32 = arith.constant 0 : i32
    %c0_i32_0 = arith.constant 0 : i32
    return %arg0, %c0_i32 : i32, i32
  }
  func.func @transform_1(%arg0: i32) -> (i32, i32) {
    %c0_i32 = arith.constant 0 : i32
    %c0_i32_0 = arith.constant 0 : i32
    %c0_i32_1 = arith.constant 0 : i32
    return %c0_i32, %c0_i32_0 : i32, i32
  }
  func.func @transform_2(%arg0: i32) -> (i32, i32, i32) {
    %c0_i32 = arith.constant 0 : i32
    %c0_i32_0 = arith.constant 0 : i32
    %c0_i32_1 = arith.constant 0 : i32
    %c0_i32_2 = arith.constant 0 : i32
    return %c0_i32, %c0_i32_0, %c0_i32_1 : i32, i32, i32
  }
  func.func @transform_3(%arg0: i32) -> (i32, i32, i32) {
    %c0_i32 = arith.constant 0 : i32
    %c0_i32_0 = arith.constant 0 : i32
    %c0_i32_1 = arith.constant 0 : i32
    %c0_i32_2 = arith.constant 0 : i32
    return %c0_i32, %c0_i32_0, %c0_i32_1 : i32, i32, i32
  }
  func.func @transform_4(%arg0: i32) -> (i32, i32) {
    %c0_i32 = arith.constant 0 : i32
    %c0_i32_0 = arith.constant 0 : i32
    return %arg0, %c0_i32 : i32, i32
  }
}

</mosaic_0001>

<llo_original>
// kernel: tpu_custom_call.1
$region0: #{tpu_custom_call.1}
  #allocation0 [shape = 'u32[]', space=smem, size = 0x4, offset = 0x4, fixed_abs, tag = 'smem constant byte address 0x4 - core index']
  #allocation1 [shape = 'u32[144,128]{1,0:T(1,128)}', space=vmem, size = 0x12000, scoped, tag = 'internal scratch']
  %s0 = inlined_call_operand.hbm [shape: bf16[8,12], index: 0, kind: input, shape index: {}]
  %s1 = inlined_call_operand.hbm [shape: bf16[12,64], index: 1, kind: input, shape index: {}]
  %s2 = inlined_call_operand.hbm [shape: bf16[4,64,64], index: 2, kind: input, shape index: {}]
  %s3 = inlined_call_operand.vmem [shape: f32[5,1,64], index: 3, kind: input, shape index: {}]
  %s4 = inlined_call_operand.vmem [shape: f32[8,2], index: 4, kind: output, shape index: {}]
  %s5 = sld [smem:[#allocation0]]
  $region38: #{tpu_custom_call.1} parent=0
    _
  %s7 = ssub.s32 1, %s5
  %s8 = scalar_select 0, %s7, %s5
  $region1: #{tpu_custom_call.1} parent=0
    #allocation2 [shape = 'u8[2048]{0}', space=vmem, size = 0x800, scoped, tag = 'input window, operand 0, single buffered']
    #allocation3 [shape = 's32[1]{0}', space=sflag, size = 0x4, scoped, tag = 'scoped memory for tpu_custom_call.1']
    #allocation4 [shape = 'u8[4096]{0}', space=vmem, size = 0x1000, scoped, tag = 'input window, operand 1, single buffered']
    #allocation5 [shape = 's32[1]{0}', space=sflag, size = 0x4, scoped, tag = 'scoped memory for tpu_custom_call.1']
    #allocation6 [shape = 'u8[65536]{0}', space=vmem, size = 0x10000, scoped, tag = 'input window, operand 2, single buffered']
    %9 = vsyncpa [#allocation3], 0
    %10 = vsyncpa [#allocation5], 0
    // Predicated region
    $region2: #{tpu_custom_call.1} parent=1 // pred_check
      _
    $region3: #{tpu_custom_call.1} parent=1 // pred_check_branch
      %12 = sbr.rel (0) target = $region5
    $region4: #{tpu_custom_call.1} parent=1 // pred_region
      %s14 = ssub.s32 64, 64
      %15 = vsyncadd [#allocation3], %s14
      %s17 = sshll.u32 [#allocation2], 4
      %s18 = int_to_ptr.vmem [resolvable:$true] %s17
      %20 = dma.hbm_to_vmem [thread:$0]  %s0, 64, %s18, [#allocation3]
    $region5: #{tpu_custom_call.1} parent=1 // pred_fallthru
      _
    // Predicated region
    $region6: #{tpu_custom_call.1} parent=1 // pred_check
      _
    $region7: #{tpu_custom_call.1} parent=1 // pred_check_branch
      %22 = sbr.rel (0) target = $region9
    $region8: #{tpu_custom_call.1} parent=1 // pred_region
      %s24 = ssub.s32 128, 128
      %25 = vsyncadd [#allocation5], %s24
      %s26 = sshll.u32 [#allocation4], 4
      %s27 = int_to_ptr.vmem [resolvable:$true] %s26
      %32 = dma.hbm_to_vmem [thread:$0]  %s1, 128, %s27, [#allocation5], 64, 64, 4
    $region9: #{tpu_custom_call.1} parent=1 // pred_fallthru
      _
    // Predicated region
    $region10: #{tpu_custom_call.1} parent=1 // pred_check
      _
    $region11: #{tpu_custom_call.1} parent=1 // pred_check_branch
      %34 = sbr.rel (0) target = $region13
    $region12: #{tpu_custom_call.1} parent=1 // pred_region
      %s36 = ssub.s32 2048, 2048
      %37 = vsyncadd [#allocation5], %s36
      %s38 = sshll.u32 [#allocation6], 4
      %s39 = int_to_ptr.vmem [resolvable:$true] %s38
      %44 = dma.hbm_to_vmem [thread:$0]  %s2, 2048, %s39, [#allocation5], 64, 64, 4
    $region13: #{tpu_custom_call.1} parent=1 // pred_fallthru
      _
    // Predicated region
    $region14: #{tpu_custom_call.1} parent=1 // pred_check
      _
    $region15: #{tpu_custom_call.1} parent=1 // pred_check_branch
      %46 = sbr.rel (0) target = $region17
    $region16: #{tpu_custom_call.1} parent=1 // pred_region
      _
    $region17: #{tpu_custom_call.1} parent=1 // pred_fallthru
      _
    // Predicated region
    $region18: #{tpu_custom_call.1} parent=1 // pred_check
      _
    $region19: #{tpu_custom_call.1} parent=1 // pred_check_branch
      %48 = sbr.rel (0) target = $region21
    $region20: #{tpu_custom_call.1} parent=1 // pred_region
      %49 = dma.done [#allocation3], 64
    $region21: #{tpu_custom_call.1} parent=1 // pred_fallthru
      _
    // Predicated region
    $region22: #{tpu_custom_call.1} parent=1 // pred_check
      _
    $region23: #{tpu_custom_call.1} parent=1 // pred_check_branch
      %51 = sbr.rel (0) target = $region25
    $region24: #{tpu_custom_call.1} parent=1 // pred_region
      %52 = dma.done [#allocation5], 128
    $region25: #{tpu_custom_call.1} parent=1 // pred_fallthru
      _
    // Predicated region
    $region26: #{tpu_custom_call.1} parent=1 // pred_check
      _
    $region27: #{tpu_custom_call.1} parent=1 // pred_check_branch
      %54 = sbr.rel (0) target = $region29
    $region28: #{tpu_custom_call.1} parent=1 // pred_region
      %55 = dma.done [#allocation5], 2048
    $region29: #{tpu_custom_call.1} parent=1 // pred_fallthru
      _
    %v57 = vld [vmem:[#allocation2] sm:$0xf]
    %v58 = vld [vmem:[#allocation4] sm:$0xf]
    %v59 = vld [vmem:[#allocation4 + $0x4] sm:$0x3]
    %v60 = vld [vmem:[%s3] sm:$0x1]
    %v62 = vlaneseq
    %v63 = vshrl.u32 %v62, 7
    %v64 = vsub.s32 0, %v63
    %v65 = vrot.slane %v60, %v64
    %v69 = vunpack.c.l.b16 %v58
    %v70 = vunpack.c.l.b16 %v59
    %v71 = vpack.c.b16 %v70, %v69
    %vm72 = vcmask 97280
    %v74 = vsel %vm72, %v57, 0
    %vm76 = vcmask 1045504
    %v78 = vsel %vm76, %v71, 0
    %80 = vmatprep.subr.bf16.mxu0 0
    %81 = vmatpush1.bf16.msra.mxu0 %v78
    %82 = vmatprep.subr.bf16.mxu0 0
    %83 = vmatpush1.bf16.msra.mxu0 0
    %84 = vmatprep.subr.bf16.mxu0 0
    %85 = vmatpush1.bf16.msra.mxu0 0
    %86 = vmatprep.subr.bf16.mxu0 0
    %87 = vmatpush1.bf16.msra.mxu0 0
    %88 = vmatprep.subr.bf16.mxu0 0
    %89 = vmatpush1.bf16.msra.mxu0 0
    %90 = vmatprep.subr.bf16.mxu0 0
    %91 = vmatpush1.bf16.msra.mxu0 0
    %92 = vmatprep.subr.bf16.mxu0 0
    %93 = vmatpush1.bf16.msra.mxu0 0
    %94 = vmatprep.subr.bf16.mxu0 0
    %95 = vmatpush1.bf16.msra.mxu0 0
    %96 = vmatprep.subr.bf16.mxu0 0
    %97 = vmatpush1.bf16.msra.mxu0 0
    %98 = vmatprep.subr.bf16.mxu0 0
    %99 = vmatpush1.bf16.msra.mxu0 0
    %100 = vmatprep.subr.bf16.mxu0 0
    %101 = vmatpush1.bf16.msra.mxu0 0
    %102 = vmatprep.subr.bf16.mxu0 0
    %103 = vmatpush1.bf16.msra.mxu0 0
    %104 = vmatprep.subr.bf16.mxu0 0
    %105 = vmatpush1.bf16.msra.mxu0 0
    %106 = vmatprep.subr.bf16.mxu0 0
    %107 = vmatpush1.bf16.msra.mxu0 0
    %108 = vmatprep.subr.bf16.mxu0 0
    %109 = vmatpush1.bf16.msra.mxu0 0
    %110 = vmatprep.subr.bf16.mxu0 0
    %111 = vmatpush1.bf16.msra.mxu0 0
    %112 = vmatprep.mubr.bf16.mxu0 0
    %113 = vmatmul.mubr.bf16.gmra.mrb[0].mxu0 %v74
    %v114 = vpop.f32.mrb[0].mxu0
    %v115 = vadd.f32 %v65, %v114
    %v116 = vpop.f32.mrb[0].mxu0
    %v117 = vpop.f32.mrb[0].mxu0
    %v118 = vpop.f32.mrb[0].mxu0
    %119 = vdwg.mxu0
    %v120 = vmax.f32 %v115, 0.0
    %v121 = vpack.c.bf16 %v120, %v120
    %v122 = vld [vmem:[#allocation6] sm:$0xf]
    %v123 = vld [vmem:[#allocation6 + $0x4] sm:$0xf]
    %v124 = vld [vmem:[#allocation6 + $0x8] sm:$0xf]
    %v125 = vld [vmem:[#allocation6 + $0xc] sm:$0xf]
    %v126 = vld [vmem:[#allocation6 + $0x10] sm:$0xf]
    %v127 = vld [vmem:[#allocation6 + $0x14] sm:$0xf]
    %v128 = vld [vmem:[#allocation6 + $0x18] sm:$0xf]
    %v129 = vld [vmem:[#allocation6 + $0x1c] sm:$0xf]
    %s130 = scalar_lea.vmem %s3, 1
    %v131 = vld [vmem:[%s130] sm:$0x1]
    %v133 = vlaneseq
    %v134 = vshrl.u32 %v133, 7
    %v135 = vsub.s32 0, %v134
    %v136 = vrot.slane %v131, %v135
    %v146 = vunpack.c.l.b16 %v122
    %v147 = vunpack.c.l.b16 %v123
    %v148 = vunpack.c.l.b16 %v124
    %v149 = vunpack.c.l.b16 %v125
    %v150 = vunpack.c.l.b16 %v126
    %v151 = vunpack.c.l.b16 %v127
    %v152 = vunpack.c.l.b16 %v128
    %v153 = vunpack.c.l.b16 %v129
    %v154 = vpack.c.b16 %v147, %v146
    %v155 = vpack.c.b16 %v149, %v148
    %v156 = vpack.c.b16 %v151, %v150
    %v157 = vpack.c.b16 %v153, %v152
    %vm162 = vcmask 523264
    %v164 = vsel %vm162, %v121, 0
    %166 = vmatprep.subr.bf16.mxu0 0
    %167 = vmatpush1.bf16.msra.mxu0 %v154
    %168 = vmatprep.subr.bf16.mxu0 0
    %169 = vmatpush1.bf16.msra.mxu0 %v155
    %170 = vmatprep.subr.bf16.mxu0 0
    %171 = vmatpush1.bf16.msra.mxu0 %v156
    %172 = vmatprep.subr.bf16.mxu0 0
    %173 = vmatpush1.bf16.msra.mxu0 %v157
    %174 = vmatprep.subr.bf16.mxu0 0
    %175 = vmatpush1.bf16.msra.mxu0 0
    %176 = vmatprep.subr.bf16.mxu0 0
    %177 = vmatpush1.bf16.msra.mxu0 0
    %178 = vmatprep.subr.bf16.mxu0 0
    %179 = vmatpush1.bf16.msra.mxu0 0
    %180 = vmatprep.subr.bf16.mxu0 0
    %181 = vmatpush1.bf16.msra.mxu0 0
    %182 = vmatprep.subr.bf16.mxu0 0
    %183 = vmatpush1.bf16.msra.mxu0 0
    %184 = vmatprep.subr.bf16.mxu0 0
    %185 = vmatpush1.bf16.msra.mxu0 0
    %186 = vmatprep.subr.bf16.mxu0 0
    %187 = vmatpush1.bf16.msra.mxu0 0
    %188 = vmatprep.subr.bf16.mxu0 0
    %189 = vmatpush1.bf16.msra.mxu0 0
    %190 = vmatprep.subr.bf16.mxu0 0
    %191 = vmatpush1.bf16.msra.mxu0 0
    %192 = vmatprep.subr.bf16.mxu0 0
    %193 = vmatpush1.bf16.msra.mxu0 0
    %194 = vmatprep.subr.bf16.mxu0 0
    %195 = vmatpush1.bf16.msra.mxu0 0
    %196 = vmatprep.subr.bf16.mxu0 0
    %197 = vmatpush1.bf16.msra.mxu0 0
    %198 = vmatprep.mubr.bf16.mxu0 0
    %199 = vmatmul.mubr.bf16.gmra.mrb[0].mxu0 %v164
    %v200 = vpop.f32.mrb[0].mxu0
    %v201 = vadd.f32 %v136, %v200
    %v202 = vpop.f32.mrb[0].mxu0
    %v203 = vpop.f32.mrb[0].mxu0
    %v204 = vpop.f32.mrb[0].mxu0
    %205 = vdwg.mxu0
    %v206 = vmax.f32 %v201, 0.0
    %v207 = vpack.c.bf16 %v206, %v206
    %s208 = scalar_lea.vmem [#allocation6], 32
    %v209 = vld [vmem:[%s208] sm:$0xf]
    %v210 = vld [vmem:[%s208 + $0x4] sm:$0xf]
    %v211 = vld [vmem:[%s208 + $0x8] sm:$0xf]
    %v212 = vld [vmem:[%s208 + $0xc] sm:$0xf]
    %v213 = vld [vmem:[%s208 + $0x10] sm:$0xf]
    %v214 = vld [vmem:[%s208 + $0x14] sm:$0xf]
    %v215 = vld [vmem:[%s208 + $0x18] sm:$0xf]
    %v216 = vld [vmem:[%s208 + $0x1c] sm:$0xf]
    %s217 = scalar_lea.vmem %s3, 2
    %v218 = vld [vmem:[%s217] sm:$0x1]
    %v220 = vlaneseq
    %v221 = vshrl.u32 %v220, 7
    %v222 = vsub.s32 0, %v221
    %v223 = vrot.slane %v218, %v222
    %v233 = vunpack.c.l.b16 %v209
    %v234 = vunpack.c.l.b16 %v210
    %v235 = vunpack.c.l.b16 %v211
    %v236 = vunpack.c.l.b16 %v212
    %v237 = vunpack.c.l.b16 %v213
    %v238 = vunpack.c.l.b16 %v214
    %v239 = vunpack.c.l.b16 %v215
    %v240 = vunpack.c.l.b16 %v216
    %v241 = vpack.c.b16 %v234, %v233
    %v242 = vpack.c.b16 %v236, %v235
    %v243 = vpack.c.b16 %v238, %v237
    %v244 = vpack.c.b16 %v240, %v239
    %v250 = vsel %vm162, %v207, 0
    %252 = vmatprep.subr.bf16.mxu0 0
    %253 = vmatpush1.bf16.msra.mxu0 %v241
    %254 = vmatprep.subr.bf16.mxu0 0
    %255 = vmatpush1.bf16.msra.mxu0 %v242
    %256 = vmatprep.subr.bf16.mxu0 0
    %257 = vmatpush1.bf16.msra.mxu0 %v243
    %258 = vmatprep.subr.bf16.mxu0 0
    %259 = vmatpush1.bf16.msra.mxu0 %v244
    %260 = vmatprep.subr.bf16.mxu0 0
    %261 = vmatpush1.bf16.msra.mxu0 0
    %262 = vmatprep.subr.bf16.mxu0 0
    %263 = vmatpush1.bf16.msra.mxu0 0
    %264 = vmatprep.subr.bf16.mxu0 0
    %265 = vmatpush1.bf16.msra.mxu0 0
    %266 = vmatprep.subr.bf16.mxu0 0
    %267 = vmatpush1.bf16.msra.mxu0 0
    %268 = vmatprep.subr.bf16.mxu0 0
    %269 = vmatpush1.bf16.msra.mxu0 0
    %270 = vmatprep.subr.bf16.mxu0 0
    %271 = vmatpush1.bf16.msra.mxu0 0
    %272 = vmatprep.subr.bf16.mxu0 0
    %273 = vmatpush1.bf16.msra.mxu0 0
    %274 = vmatprep.subr.bf16.mxu0 0
    %275 = vmatpush1.bf16.msra.mxu0 0
    %276 = vmatprep.subr.bf16.mxu0 0
    %277 = vmatpush1.bf16.msra.mxu0 0
    %278 = vmatprep.subr.bf16.mxu0 0
    %279 = vmatpush1.bf16.msra.mxu0 0
    %280 = vmatprep.subr.bf16.mxu0 0
    %281 = vmatpush1.bf16.msra.mxu0 0
    %282 = vmatprep.subr.bf16.mxu0 0
    %283 = vmatpush1.bf16.msra.mxu0 0
    %284 = vmatprep.mubr.bf16.mxu0 0
    %285 = vmatmul.mubr.bf16.gmra.mrb[0].mxu0 %v250
    %v286 = vpop.f32.mrb[0].mxu0
    %v287 = vadd.f32 %v223, %v286
    %v288 = vpop.f32.mrb[0].mxu0
    %v289 = vpop.f32.mrb[0].mxu0
    %v290 = vpop.f32.mrb[0].mxu0
    %291 = vdwg.mxu0
    %v292 = vmax.f32 %v287, 0.0
    %v293 = vpack.c.bf16 %v292, %v292
    %s294 = scalar_lea.vmem [#allocation6], 64
    %v295 = vld [vmem:[%s294] sm:$0xf]
    %v296 = vld [vmem:[%s294 + $0x4] sm:$0xf]
    %v297 = vld [vmem:[%s294 + $0x8] sm:$0xf]
    %v298 = vld [vmem:[%s294 + $0xc] sm:$0xf]
    %v299 = vld [vmem:[%s294 + $0x10] sm:$0xf]
    %v300 = vld [vmem:[%s294 + $0x14] sm:$0xf]
    %v301 = vld [vmem:[%s294 + $0x18] sm:$0xf]
    %v302 = vld [vmem:[%s294 + $0x1c] sm:$0xf]
    %s303 = scalar_lea.vmem %s3, 3
    %v304 = vld [vmem:[%s303] sm:$0x1]
    %v306 = vlaneseq
    %v307 = vshrl.u32 %v306, 7
    %v308 = vsub.s32 0, %v307
    %v309 = vrot.slane %v304, %v308
    %v319 = vunpack.c.l.b16 %v295
    %v320 = vunpack.c.l.b16 %v296
    %v321 = vunpack.c.l.b16 %v297
    %v322 = vunpack.c.l.b16 %v298
    %v323 = vunpack.c.l.b16 %v299
    %v324 = vunpack.c.l.b16 %v300
    %v325 = vunpack.c.l.b16 %v301
    %v326 = vunpack.c.l.b16 %v302
    %v327 = vpack.c.b16 %v320, %v319
    %v328 = vpack.c.b16 %v322, %v321
    %v329 = vpack.c.b16 %v324, %v323
    %v330 = vpack.c.b16 %v326, %v325
    %v336 = vsel %vm162, %v293, 0
    %338 = vmatprep.subr.bf16.mxu0 0
    %339 = vmatpush1.bf16.msra.mxu0 %v327
    %340 = vmatprep.subr.bf16.mxu0 0
    %341 = vmatpush1.bf16.msra.mxu0 %v328
    %342 = vmatprep.subr.bf16.mxu0 0
    %343 = vmatpush1.bf16.msra.mxu0 %v329
    %344 = vmatprep.subr.bf16.mxu0 0
    %345 = vmatpush1.bf16.msra.mxu0 %v330
    %346 = vmatprep.subr.bf16.mxu0 0
    %347 = vmatpush1.bf16.msra.mxu0 0
    %348 = vmatprep.subr.bf16.mxu0 0
    %349 = vmatpush1.bf16.msra.mxu0 0
    %350 = vmatprep.subr.bf16.mxu0 0
    %351 = vmatpush1.bf16.msra.mxu0 0
    %352 = vmatprep.subr.bf16.mxu0 0
    %353 = vmatpush1.bf16.msra.mxu0 0
    %354 = vmatprep.subr.bf16.mxu0 0
    %355 = vmatpush1.bf16.msra.mxu0 0
    %356 = vmatprep.subr.bf16.mxu0 0
    %357 = vmatpush1.bf16.msra.mxu0 0
    %358 = vmatprep.subr.bf16.mxu0 0
    %359 = vmatpush1.bf16.msra.mxu0 0
    %360 = vmatprep.subr.bf16.mxu0 0
    %361 = vmatpush1.bf16.msra.mxu0 0
    %362 = vmatprep.subr.bf16.mxu0 0
    %363 = vmatpush1.bf16.msra.mxu0 0
    %364 = vmatprep.subr.bf16.mxu0 0
    %365 = vmatpush1.bf16.msra.mxu0 0
    %366 = vmatprep.subr.bf16.mxu0 0
    %367 = vmatpush1.bf16.msra.mxu0 0
    %368 = vmatprep.subr.bf16.mxu0 0
    %369 = vmatpush1.bf16.msra.mxu0 0
    %370 = vmatprep.mubr.bf16.mxu0 0
    %371 = vmatmul.mubr.bf16.gmra.mrb[0].mxu0 %v336
    %v372 = vpop.f32.mrb[0].mxu0
    %v373 = vadd.f32 %v309, %v372
    %v374 = vpop.f32.mrb[0].mxu0
    %v375 = vpop.f32.mrb[0].mxu0
    %v376 = vpop.f32.mrb[0].mxu0
    %377 = vdwg.mxu0
    %v378 = vmax.f32 %v373, 0.0
    %v379 = vpack.c.bf16 %v378, %v378
    %s380 = scalar_lea.vmem [#allocation6], 96
    %v381 = vld [vmem:[%s380] sm:$0xf]
    %v382 = vld [vmem:[%s380 + $0x4] sm:$0xf]
    %v383 = vld [vmem:[%s380 + $0x8] sm:$0xf]
    %v384 = vld [vmem:[%s380 + $0xc] sm:$0xf]
    %v385 = vld [vmem:[%s380 + $0x10] sm:$0xf]
    %v386 = vld [vmem:[%s380 + $0x14] sm:$0xf]
    %v387 = vld [vmem:[%s380 + $0x18] sm:$0xf]
    %v388 = vld [vmem:[%s380 + $0x1c] sm:$0xf]
    %s389 = scalar_lea.vmem %s3, 4
    %v390 = vld [vmem:[%s389] sm:$0x1]
    %v392 = vlaneseq
    %v393 = vshrl.u32 %v392, 7
    %v394 = vsub.s32 0, %v393
    %v395 = vrot.slane %v390, %v394
    %v405 = vunpack.c.l.b16 %v381
    %v406 = vunpack.c.l.b16 %v382
    %v407 = vunpack.c.l.b16 %v383
    %v408 = vunpack.c.l.b16 %v384
    %v409 = vunpack.c.l.b16 %v385
    %v410 = vunpack.c.l.b16 %v386
    %v411 = vunpack.c.l.b16 %v387
    %v412 = vunpack.c.l.b16 %v388
    %v413 = vpack.c.b16 %v406, %v405
    %v414 = vpack.c.b16 %v408, %v407
    %v415 = vpack.c.b16 %v410, %v409
    %v416 = vpack.c.b16 %v412, %v411
    %v422 = vsel %vm162, %v379, 0
    %424 = vmatprep.subr.bf16.mxu0 0
    %425 = vmatpush1.bf16.msra.mxu0 %v413
    %426 = vmatprep.subr.bf16.mxu0 0
    %427 = vmatpush1.bf16.msra.mxu0 %v414
    %428 = vmatprep.subr.bf16.mxu0 0
    %429 = vmatpush1.bf16.msra.mxu0 %v415
    %430 = vmatprep.subr.bf16.mxu0 0
    %431 = vmatpush1.bf16.msra.mxu0 %v416
    %432 = vmatprep.subr.bf16.mxu0 0
    %433 = vmatpush1.bf16.msra.mxu0 0
    %434 = vmatprep.subr.bf16.mxu0 0
    %435 = vmatpush1.bf16.msra.mxu0 0
    %436 = vmatprep.subr.bf16.mxu0 0
    %437 = vmatpush1.bf16.msra.mxu0 0
    %438 = vmatprep.subr.bf16.mxu0 0
    %439 = vmatpush1.bf16.msra.mxu0 0
    %440 = vmatprep.subr.bf16.mxu0 0
    %441 = vmatpush1.bf16.msra.mxu0 0
    %442 = vmatprep.subr.bf16.mxu0 0
    %443 = vmatpush1.bf16.msra.mxu0 0
    %444 = vmatprep.subr.bf16.mxu0 0
    %445 = vmatpush1.bf16.msra.mxu0 0
    %446 = vmatprep.subr.bf16.mxu0 0
    %447 = vmatpush1.bf16.msra.mxu0 0
    %448 = vmatprep.subr.bf16.mxu0 0
    %449 = vmatpush1.bf16.msra.mxu0 0
    %450 = vmatprep.subr.bf16.mxu0 0
    %451 = vmatpush1.bf16.msra.mxu0 0
    %452 = vmatprep.subr.bf16.mxu0 0
    %453 = vmatpush1.bf16.msra.mxu0 0
    %454 = vmatprep.subr.bf16.mxu0 0
    %455 = vmatpush1.bf16.msra.mxu0 0
    %456 = vmatprep.mubr.bf16.mxu0 0
    %457 = vmatmul.mubr.bf16.gmra.mrb[0].mxu0 %v422
    %v458 = vpop.f32.mrb[0].mxu0
    %v459 = vadd.f32 %v395, %v458
    %v460 = vpop.f32.mrb[0].mxu0
    %v461 = vpop.f32.mrb[0].mxu0
    %v462 = vpop.f32.mrb[0].mxu0
    %463 = vdwg.mxu0
    %vm464 = vcmask 15360
    %v465 = vsel %vm464, %v459, -inf
    %466 = vmax.xlane.f32.xlu0 %v465
    %v467 = vpop.xlane.xlu0 %466
    %v468 = vsub.f32 %v459, %v467
    %v469 = vmul.f32 %v468, 1.442695
    %v470 = vpow.pop %v469
    %v471 = vsel %vm464, %v470, 0.0
    %472 = vadd.xlane.f32.xlu0 %v471
    %v473 = vpop.xlane.xlu0 %472
    %v474 = vrcp.pop %v473
    %v475 = vmul.f32 %v470, %v474
    %476 = vst.msk [vmem:[%s4] sm:$0xff] %vm464, %v475
    // Predicated region
    $region30: #{tpu_custom_call.1} parent=1 // pred_check
      _
    $region31: #{tpu_custom_call.1} parent=1 // pred_check_branch
      %478 = sbr.rel (0) target = $region33
    $region32: #{tpu_custom_call.1} parent=1 // pred_region
      _
    $region33: #{tpu_custom_call.1} parent=1 // pred_fallthru
      _
    // Predicated region
    $region34: #{tpu_custom_call.1} parent=1 // pred_check
      _
    $region35: #{tpu_custom_call.1} parent=1 // pred_check_branch
      %480 = sbr.rel (0) target = $region37
    $region36: #{tpu_custom_call.1} parent=1 // pred_region
      _
    $region37: #{tpu_custom_call.1} parent=1 // pred_fallthru
      _
    %481 = vsyncpa [#allocation3], 1
    %482 = vsyncpa [#allocation5], 1

</llo_original>
